<compile_context>
chip_gen: v5e
topology: v5e:2x2
jax: 0.10.0
libtpu: 0.0.40
codegen_flags: <defaults>
</compile_context>

<pallas_src>
import functools

import jax
import jax.numpy as jnp
from jax import lax
from jax.experimental import pallas as pl
from jax.experimental.pallas import tpu as pltpu


def lstm_tagger_kernel(indices_ref, proj_ref, w_hh_ref, w_tag_ref, b_tag_ref,
                       out_ref, lstm_out_ref, *, seq_len, hidden):
    """Single-sequence LSTM tagger.

    indices_ref  : SMEM (seq_len,)      int32  token ids (pre-clamped)
    proj_ref     : VMEM (vocab, 4H)     f32    fused emb @ W_ih^T + b_ih + b_hh
    w_hh_ref     : VMEM (H, 4H)         f32    pre-transposed recurrent weights
    w_tag_ref    : VMEM (H, T_pad)      f32    pre-transposed, lane-padded
    b_tag_ref    : VMEM (1, T_pad)      f32    -1e30 in padded lanes
    out_ref      : VMEM (seq_len, T_pad) f32   log-probs (lane-dense store)
    lstm_out_ref : VMEM scratch (seq_len, H) f32
    """
    w_hh_t = w_hh_ref[...]                                      # (H, 4H), loop-invariant

    h = jnp.zeros((1, hidden), jnp.float32)
    c = jnp.zeros((1, hidden), jnp.float32)

    # Fully unrolled serial recurrence; only h @ W_hh is on the critical path.
    for t in range(seq_len):
        # Lane-dense (1, 4H) gather from the fused projection table.  It does
        # not depend on h/c, so the scheduler can hoist it off the chain.
        x_proj_t = proj_ref[pl.ds(indices_ref[t], 1), :]        # (1, 4H)
        gates = x_proj_t + jnp.dot(h, w_hh_t,
                                   preferred_element_type=jnp.float32)

        # gates is one (1, 128) lane-dense row: two whole-row EUP pushes,
        # then static lane slices for the four gates (torch order i, f, g, o).
        sg = jax.nn.sigmoid(gates)
        th = jnp.tanh(gates)
        i_g = sg[:, 0 * hidden:1 * hidden]
        f_g = sg[:, 1 * hidden:2 * hidden]
        g_g = th[:, 2 * hidden:3 * hidden]
        o_g = sg[:, 3 * hidden:4 * hidden]

        c = f_g * c + i_g * g_g
        h = o_g * jnp.tanh(c)

        # vst slot is idle in this latency-bound loop: free per-step store;
        # also bounds vreg live ranges as seq_len grows.
        lstm_out_ref[pl.ds(t, 1), :] = h

    # hidden2tag on the whole trajectory (one MXU matmul) + log_softmax.
    lstm_out = lstm_out_ref[...]                                # (S, H)
    tag_space = (jnp.dot(lstm_out, w_tag_ref[...],
                         preferred_element_type=jnp.float32)
                 + b_tag_ref[...])                              # (S, T_pad)
    m = jnp.max(tag_space, axis=1, keepdims=True)
    shifted = tag_space - m
    lse = jnp.log(jnp.sum(jnp.exp(shifted), axis=1, keepdims=True))
    out_ref[...] = shifted - lse                                # lane-dense store


def prepare_params(emb_table, w_ih, w_hh, b_ih, b_hh, w_tag, b_tag, *, tagset):
    """Amortized (per-weight-update) parameter prep: layout plumbing plus the
    embedding/input-projection fusion (x @ W_ih^T == (E @ W_ih^T)[idx])."""
    hidden = int(w_hh.shape[1])
    t_pad = ((tagset + 127) // 128) * 128

    proj_table = (jnp.asarray(emb_table, jnp.float32)
                  @ jnp.asarray(w_ih, jnp.float32).T
                  + jnp.asarray(b_ih, jnp.float32)
                  + jnp.asarray(b_hh, jnp.float32))             # (vocab, 4H)
    w_hh_t = jnp.asarray(w_hh, jnp.float32).T                   # (H, 4H)
    w_tag_pad = jnp.zeros((hidden, t_pad), jnp.float32).at[:, :tagset].set(
        jnp.asarray(w_tag, jnp.float32).T)                      # (H, T_pad)
    b_tag_pad = jnp.full((1, t_pad), -1e30, jnp.float32).at[0, :tagset].set(
        jnp.asarray(b_tag, jnp.float32))                        # (1, T_pad)
    return proj_table, w_hh_t, w_tag_pad, b_tag_pad


def lstm_tagger_forward(indices, prepped, *, hidden, tagset):
    """indices: int32 (seq_len,); returns (seq_len, tagset) log-probs."""
    proj_table, w_hh_t, w_tag_pad, b_tag_pad = prepped
    seq_len = int(indices.shape[0])
    vocab = int(proj_table.shape[0])
    t_pad = int(w_tag_pad.shape[1])

    # VMEM gathers are not bounds-checked -> clamp token ids host-side.
    idx = jnp.clip(indices.astype(jnp.int32), 0, vocab - 1)

    vmem = pl.BlockSpec(memory_space=pltpu.MemorySpace.VMEM)
    smem = pl.BlockSpec(memory_space=pltpu.MemorySpace.SMEM)

    kernel = functools.partial(lstm_tagger_kernel, seq_len=seq_len, hidden=hidden)

    out_pad = pl.pallas_call(
        kernel,
        out_shape=jax.ShapeDtypeStruct((seq_len, t_pad), jnp.float32),
        in_specs=[smem, vmem, vmem, vmem, vmem],
        out_specs=vmem,
        scratch_shapes=[pltpu.VMEM((seq_len, hidden), jnp.float32)],
    )(idx, proj_table, w_hh_t, w_tag_pad, b_tag_pad)

    # Padded lanes carry ~-1e30 log-probs; this slice is mandatory.
    return out_pad[:, :tagset]


def lstm_tagger_ref(indices, emb_table, w_ih, w_hh, b_ih, b_hh, w_tag, b_tag):
    """Pure JAX reference mirroring torch nn.Embedding/nn.LSTM/nn.Linear."""
    hidden = w_hh.shape[1]
    embeds = emb_table[indices]                                  # (S, E)

    def step(carry, x_t):
        h, c = carry
        gates = x_t @ w_ih.T + b_ih + h @ w_hh.T + b_hh
        i = jax.nn.sigmoid(gates[0 * hidden:1 * hidden])
        f = jax.nn.sigmoid(gates[1 * hidden:2 * hidden])
        g = jnp.tanh(gates[2 * hidden:3 * hidden])
        o = jax.nn.sigmoid(gates[3 * hidden:4 * hidden])
        c_new = f * c + i * g
        h_new = o * jnp.tanh(c_new)
        return (h_new, c_new), h_new

    h0 = jnp.zeros((hidden,), jnp.float32)
    _, lstm_out = lax.scan(step, (h0, h0), embeds)
    tag_space = lstm_out @ w_tag.T + b_tag
    return jax.nn.log_softmax(tag_space, axis=1)


if __name__ == "__main__":
    # Small, module-consistent sizes.
    vocab_size = 10
    embedding_dim = 16
    hidden_dim = 32
    tagset_size = 4
    seq_len = 8

    key = jax.random.PRNGKey(0)
    ks = jax.random.split(key, 8)

    # Deterministic synthetic parameters (shapes follow nn.Embedding / nn.LSTM / nn.Linear).
    emb_table = jax.random.normal(ks[0], (vocab_size, embedding_dim), jnp.float32) * 0.5
    w_ih = jax.random.normal(ks[1], (4 * hidden_dim, embedding_dim), jnp.float32) * 0.1
    w_hh = jax.random.normal(ks[2], (4 * hidden_dim, hidden_dim), jnp.float32) * 0.1
    b_ih = jax.random.normal(ks[3], (4 * hidden_dim,), jnp.float32) * 0.1
    b_hh = jax.random.normal(ks[4], (4 * hidden_dim,), jnp.float32) * 0.1
    w_tag = jax.random.normal(ks[5], (tagset_size, hidden_dim), jnp.float32) * 0.1
    b_tag = jax.random.normal(ks[6], (tagset_size,), jnp.float32) * 0.1

    # The torch module's vocab_to_ix dict lookup (strings -> ids) is host-side
    # glue; we start from the integer indices it would produce.
    indices = jax.random.randint(ks[7], (seq_len,), 0, vocab_size, jnp.int32)

    prepped = prepare_params(emb_table, w_ih, w_hh, b_ih, b_hh, w_tag, b_tag,
                             tagset=tagset_size)
    out = lstm_tagger_forward(indices, prepped, hidden=hidden_dim,
                              tagset=tagset_size)
    out = jax.block_until_ready(out)

    ref = lstm_tagger_ref(indices, emb_table, w_ih, w_hh, b_ih, b_hh, w_tag, b_tag)
    assert out.shape == (seq_len, tagset_size)
    assert jnp.allclose(out, ref, atol=1e-3, rtol=1e-3), "mismatch vs JAX reference"

    print("KERNEL_OK")
</pallas_src>

<mosaic_0001>
module attributes {stable_mosaic.version = 11 : i64} {
  func.func @lstm_tagger_kernel(%arg0: memref<8xi32, #tpu.memory_space<smem>>, %arg1: memref<10x128xf32, #tpu.memory_space<vmem>>, %arg2: memref<32x128xf32, #tpu.memory_space<vmem>>, %arg3: memref<32x128xf32, #tpu.memory_space<vmem>>, %arg4: memref<1x128xf32, #tpu.memory_space<vmem>>, %arg5: memref<8x128xf32, #tpu.memory_space<vmem>>, %arg6: memref<8x32xf32, #tpu.memory_space<vmem>>) attributes {dimension_semantics = [], scalar_prefetch = 0 : i64, scratch_operands = 1 : i64, tpu.core_type = #tpu.core_type<tc>} {
    %c0 = arith.constant 0 : index
    %c0_0 = arith.constant 0 : index
    %0 = vector.load %arg2[%c0, %c0_0] : memref<32x128xf32, #tpu.memory_space<vmem>>, vector<32x128xf32>
    %cst = arith.constant 0.000000e+00 : f32
    %1 = vector.broadcast %cst : f32 to vector<1x32xf32>
    %cst_1 = arith.constant 0.000000e+00 : f32
    %2 = vector.broadcast %cst_1 : f32 to vector<1x32xf32>
    %c0_2 = arith.constant 0 : index
    %3 = memref.load %arg0[%c0_2] : memref<8xi32, #tpu.memory_space<smem>>
    %4 = arith.index_cast %3 : i32 to index
    %c0_3 = arith.constant 0 : index
    %5 = vector.load %arg1[%4, %c0_3] : memref<10x128xf32, #tpu.memory_space<vmem>>, vector<1x128xf32>
    %cst_4 = arith.constant dense<0.000000e+00> : vector<1x128xf32>
    %6 = tpu.matmul %1, %0, %cst_4 {dimension_numbers = #tpu.dot_dimension_numbers<[1], [0], [0], [1], [0, 0, 1, 1], [], []>} : vector<1x32xf32>, vector<32x128xf32>, vector<1x128xf32> -> vector<1x128xf32>
    %7 = arith.addf %5, %6 : vector<1x128xf32>
    %8 = arith.negf %7 : vector<1x128xf32>
    %9 = math.exp %8 : vector<1x128xf32>
    %cst_5 = arith.constant 1.000000e+00 : f32
    %10 = vector.broadcast %cst_5 : f32 to vector<1x128xf32>
    %11 = arith.addf %10, %9 : vector<1x128xf32>
    %12 = arith.divf %10, %11 : vector<1x128xf32>
    %13 = math.tanh %7 : vector<1x128xf32>
    %14 = vector.extract_strided_slice %12 {offsets = [0, 0], sizes = [1, 32], strides = [1, 1]} : vector<1x128xf32> to vector<1x32xf32>
    %15 = vector.extract_strided_slice %12 {offsets = [0, 32], sizes = [1, 32], strides = [1, 1]} : vector<1x128xf32> to vector<1x32xf32>
    %16 = vector.extract_strided_slice %13 {offsets = [0, 64], sizes = [1, 32], strides = [1, 1]} : vector<1x128xf32> to vector<1x32xf32>
    %17 = vector.extract_strided_slice %12 {offsets = [0, 96], sizes = [1, 32], strides = [1, 1]} : vector<1x128xf32> to vector<1x32xf32>
    %18 = arith.mulf %15, %2 : vector<1x32xf32>
    %19 = arith.mulf %14, %16 : vector<1x32xf32>
    %20 = arith.addf %18, %19 : vector<1x32xf32>
    %21 = math.tanh %20 : vector<1x32xf32>
    %22 = arith.mulf %17, %21 : vector<1x32xf32>
    %c0_6 = arith.constant 0 : index
    %c0_7 = arith.constant 0 : index
    %23 = vector.load %arg6[%c0_6, %c0_7] : memref<8x32xf32, #tpu.memory_space<vmem>>, vector<1x32xf32>
    tpu.vector_store %arg6[%c0_6, %c0_7], %22 {strides = array<i32>} : memref<8x32xf32, #tpu.memory_space<vmem>>, vector<1x32xf32>,
    %c1 = arith.constant 1 : index
    %24 = memref.load %arg0[%c1] : memref<8xi32, #tpu.memory_space<smem>>
    %25 = arith.index_cast %24 : i32 to index
    %c0_8 = arith.constant 0 : index
    %26 = vector.load %arg1[%25, %c0_8] : memref<10x128xf32, #tpu.memory_space<vmem>>, vector<1x128xf32>
    %cst_9 = arith.constant dense<0.000000e+00> : vector<1x128xf32>
    %27 = tpu.matmul %22, %0, %cst_9 {dimension_numbers = #tpu.dot_dimension_numbers<[1], [0], [0], [1], [0, 0, 1, 1], [], []>} : vector<1x32xf32>, vector<32x128xf32>, vector<1x128xf32> -> vector<1x128xf32>
    %28 = arith.addf %26, %27 : vector<1x128xf32>
    %29 = arith.negf %28 : vector<1x128xf32>
    %30 = math.exp %29 : vector<1x128xf32>
    %cst_10 = arith.constant 1.000000e+00 : f32
    %31 = vector.broadcast %cst_10 : f32 to vector<1x128xf32>
    %32 = arith.addf %31, %30 : vector<1x128xf32>
    %33 = arith.divf %31, %32 : vector<1x128xf32>
    %34 = math.tanh %28 : vector<1x128xf32>
    %35 = vector.extract_strided_slice %33 {offsets = [0, 0], sizes = [1, 32], strides = [1, 1]} : vector<1x128xf32> to vector<1x32xf32>
    %36 = vector.extract_strided_slice %33 {offsets = [0, 32], sizes = [1, 32], strides = [1, 1]} : vector<1x128xf32> to vector<1x32xf32>
    %37 = vector.extract_strided_slice %34 {offsets = [0, 64], sizes = [1, 32], strides = [1, 1]} : vector<1x128xf32> to vector<1x32xf32>
    %38 = vector.extract_strided_slice %33 {offsets = [0, 96], sizes = [1, 32], strides = [1, 1]} : vector<1x128xf32> to vector<1x32xf32>
    %39 = arith.mulf %36, %20 : vector<1x32xf32>
    %40 = arith.mulf %35, %37 : vector<1x32xf32>
    %41 = arith.addf %39, %40 : vector<1x32xf32>
    %42 = math.tanh %41 : vector<1x32xf32>
    %43 = arith.mulf %38, %42 : vector<1x32xf32>
    %c1_11 = arith.constant 1 : index
    %c0_12 = arith.constant 0 : index
    %44 = vector.load %arg6[%c1_11, %c0_12] : memref<8x32xf32, #tpu.memory_space<vmem>>, vector<1x32xf32>
    tpu.vector_store %arg6[%c1_11, %c0_12], %43 {strides = array<i32>} : memref<8x32xf32, #tpu.memory_space<vmem>>, vector<1x32xf32>,
    %c2 = arith.constant 2 : index
    %45 = memref.load %arg0[%c2] : memref<8xi32, #tpu.memory_space<smem>>
    %46 = arith.index_cast %45 : i32 to index
    %c0_13 = arith.constant 0 : index
    %47 = vector.load %arg1[%46, %c0_13] : memref<10x128xf32, #tpu.memory_space<vmem>>, vector<1x128xf32>
    %cst_14 = arith.constant dense<0.000000e+00> : vector<1x128xf32>
    %48 = tpu.matmul %43, %0, %cst_14 {dimension_numbers = #tpu.dot_dimension_numbers<[1], [0], [0], [1], [0, 0, 1, 1], [], []>} : vector<1x32xf32>, vector<32x128xf32>, vector<1x128xf32> -> vector<1x128xf32>
    %49 = arith.addf %47, %48 : vector<1x128xf32>
    %50 = arith.negf %49 : vector<1x128xf32>
    %51 = math.exp %50 : vector<1x128xf32>
    %cst_15 = arith.constant 1.000000e+00 : f32
    %52 = vector.broadcast %cst_15 : f32 to vector<1x128xf32>
    %53 = arith.addf %52, %51 : vector<1x128xf32>
    %54 = arith.divf %52, %53 : vector<1x128xf32>
    %55 = math.tanh %49 : vector<1x128xf32>
    %56 = vector.extract_strided_slice %54 {offsets = [0, 0], sizes = [1, 32], strides = [1, 1]} : vector<1x128xf32> to vector<1x32xf32>
    %57 = vector.extract_strided_slice %54 {offsets = [0, 32], sizes = [1, 32], strides = [1, 1]} : vector<1x128xf32> to vector<1x32xf32>
    %58 = vector.extract_strided_slice %55 {offsets = [0, 64], sizes = [1, 32], strides = [1, 1]} : vector<1x128xf32> to vector<1x32xf32>
    %59 = vector.extract_strided_slice %54 {offsets = [0, 96], sizes = [1, 32], strides = [1, 1]} : vector<1x128xf32> to vector<1x32xf32>
    %60 = arith.mulf %57, %41 : vector<1x32xf32>
    %61 = arith.mulf %56, %58 : vector<1x32xf32>
    %62 = arith.addf %60, %61 : vector<1x32xf32>
    %63 = math.tanh %62 : vector<1x32xf32>
    %64 = arith.mulf %59, %63 : vector<1x32xf32>
    %c2_16 = arith.constant 2 : index
    %c0_17 = arith.constant 0 : index
    %65 = vector.load %arg6[%c2_16, %c0_17] : memref<8x32xf32, #tpu.memory_space<vmem>>, vector<1x32xf32>
    tpu.vector_store %arg6[%c2_16, %c0_17], %64 {strides = array<i32>} : memref<8x32xf32, #tpu.memory_space<vmem>>, vector<1x32xf32>,
    %c3 = arith.constant 3 : index
    %66 = memref.load %arg0[%c3] : memref<8xi32, #tpu.memory_space<smem>>
    %67 = arith.index_cast %66 : i32 to index
    %c0_18 = arith.constant 0 : index
    %68 = vector.load %arg1[%67, %c0_18] : memref<10x128xf32, #tpu.memory_space<vmem>>, vector<1x128xf32>
    %cst_19 = arith.constant dense<0.000000e+00> : vector<1x128xf32>
    %69 = tpu.matmul %64, %0, %cst_19 {dimension_numbers = #tpu.dot_dimension_numbers<[1], [0], [0], [1], [0, 0, 1, 1], [], []>} : vector<1x32xf32>, vector<32x128xf32>, vector<1x128xf32> -> vector<1x128xf32>
    %70 = arith.addf %68, %69 : vector<1x128xf32>
    %71 = arith.negf %70 : vector<1x128xf32>
    %72 = math.exp %71 : vector<1x128xf32>
    %cst_20 = arith.constant 1.000000e+00 : f32
    %73 = vector.broadcast %cst_20 : f32 to vector<1x128xf32>
    %74 = arith.addf %73, %72 : vector<1x128xf32>
    %75 = arith.divf %73, %74 : vector<1x128xf32>
    %76 = math.tanh %70 : vector<1x128xf32>
    %77 = vector.extract_strided_slice %75 {offsets = [0, 0], sizes = [1, 32], strides = [1, 1]} : vector<1x128xf32> to vector<1x32xf32>
    %78 = vector.extract_strided_slice %75 {offsets = [0, 32], sizes = [1, 32], strides = [1, 1]} : vector<1x128xf32> to vector<1x32xf32>
    %79 = vector.extract_strided_slice %76 {offsets = [0, 64], sizes = [1, 32], strides = [1, 1]} : vector<1x128xf32> to vector<1x32xf32>
    %80 = vector.extract_strided_slice %75 {offsets = [0, 96], sizes = [1, 32], strides = [1, 1]} : vector<1x128xf32> to vector<1x32xf32>
    %81 = arith.mulf %78, %62 : vector<1x32xf32>
    %82 = arith.mulf %77, %79 : vector<1x32xf32>
    %83 = arith.addf %81, %82 : vector<1x32xf32>
    %84 = math.tanh %83 : vector<1x32xf32>
    %85 = arith.mulf %80, %84 : vector<1x32xf32>
    %c3_21 = arith.constant 3 : index
    %c0_22 = arith.constant 0 : index
    %86 = vector.load %arg6[%c3_21, %c0_22] : memref<8x32xf32, #tpu.memory_space<vmem>>, vector<1x32xf32>
    tpu.vector_store %arg6[%c3_21, %c0_22], %85 {strides = array<i32>} : memref<8x32xf32, #tpu.memory_space<vmem>>, vector<1x32xf32>,
    %c4 = arith.constant 4 : index
    %87 = memref.load %arg0[%c4] : memref<8xi32, #tpu.memory_space<smem>>
    %88 = arith.index_cast %87 : i32 to index
    %c0_23 = arith.constant 0 : index
    %89 = vector.load %arg1[%88, %c0_23] : memref<10x128xf32, #tpu.memory_space<vmem>>, vector<1x128xf32>
    %cst_24 = arith.constant dense<0.000000e+00> : vector<1x128xf32>
    %90 = tpu.matmul %85, %0, %cst_24 {dimension_numbers = #tpu.dot_dimension_numbers<[1], [0], [0], [1], [0, 0, 1, 1], [], []>} : vector<1x32xf32>, vector<32x128xf32>, vector<1x128xf32> -> vector<1x128xf32>
    %91 = arith.addf %89, %90 : vector<1x128xf32>
    %92 = arith.negf %91 : vector<1x128xf32>
    %93 = math.exp %92 : vector<1x128xf32>
    %cst_25 = arith.constant 1.000000e+00 : f32
    %94 = vector.broadcast %cst_25 : f32 to vector<1x128xf32>
    %95 = arith.addf %94, %93 : vector<1x128xf32>
    %96 = arith.divf %94, %95 : vector<1x128xf32>
    %97 = math.tanh %91 : vector<1x128xf32>
    %98 = vector.extract_strided_slice %96 {offsets = [0, 0], sizes = [1, 32], strides = [1, 1]} : vector<1x128xf32> to vector<1x32xf32>
    %99 = vector.extract_strided_slice %96 {offsets = [0, 32], sizes = [1, 32], strides = [1, 1]} : vector<1x128xf32> to vector<1x32xf32>
    %100 = vector.extract_strided_slice %97 {offsets = [0, 64], sizes = [1, 32], strides = [1, 1]} : vector<1x128xf32> to vector<1x32xf32>
    %101 = vector.extract_strided_slice %96 {offsets = [0, 96], sizes = [1, 32], strides = [1, 1]} : vector<1x128xf32> to vector<1x32xf32>
    %102 = arith.mulf %99, %83 : vector<1x32xf32>
    %103 = arith.mulf %98, %100 : vector<1x32xf32>
    %104 = arith.addf %102, %103 : vector<1x32xf32>
    %105 = math.tanh %104 : vector<1x32xf32>
    %106 = arith.mulf %101, %105 : vector<1x32xf32>
    %c4_26 = arith.constant 4 : index
    %c0_27 = arith.constant 0 : index
    %107 = vector.load %arg6[%c4_26, %c0_27] : memref<8x32xf32, #tpu.memory_space<vmem>>, vector<1x32xf32>
    tpu.vector_store %arg6[%c4_26, %c0_27], %106 {strides = array<i32>} : memref<8x32xf32, #tpu.memory_space<vmem>>, vector<1x32xf32>,
    %c5 = arith.constant 5 : index
    %108 = memref.load %arg0[%c5] : memref<8xi32, #tpu.memory_space<smem>>
    %109 = arith.index_cast %108 : i32 to index
    %c0_28 = arith.constant 0 : index
    %110 = vector.load %arg1[%109, %c0_28] : memref<10x128xf32, #tpu.memory_space<vmem>>, vector<1x128xf32>
    %cst_29 = arith.constant dense<0.000000e+00> : vector<1x128xf32>
    %111 = tpu.matmul %106, %0, %cst_29 {dimension_numbers = #tpu.dot_dimension_numbers<[1], [0], [0], [1], [0, 0, 1, 1], [], []>} : vector<1x32xf32>, vector<32x128xf32>, vector<1x128xf32> -> vector<1x128xf32>
    %112 = arith.addf %110, %111 : vector<1x128xf32>
    %113 = arith.negf %112 : vector<1x128xf32>
    %114 = math.exp %113 : vector<1x128xf32>
    %cst_30 = arith.constant 1.000000e+00 : f32
    %115 = vector.broadcast %cst_30 : f32 to vector<1x128xf32>
    %116 = arith.addf %115, %114 : vector<1x128xf32>
    %117 = arith.divf %115, %116 : vector<1x128xf32>
    %118 = math.tanh %112 : vector<1x128xf32>
    %119 = vector.extract_strided_slice %117 {offsets = [0, 0], sizes = [1, 32], strides = [1, 1]} : vector<1x128xf32> to vector<1x32xf32>
    %120 = vector.extract_strided_slice %117 {offsets = [0, 32], sizes = [1, 32], strides = [1, 1]} : vector<1x128xf32> to vector<1x32xf32>
    %121 = vector.extract_strided_slice %118 {offsets = [0, 64], sizes = [1, 32], strides = [1, 1]} : vector<1x128xf32> to vector<1x32xf32>
    %122 = vector.extract_strided_slice %117 {offsets = [0, 96], sizes = [1, 32], strides = [1, 1]} : vector<1x128xf32> to vector<1x32xf32>
    %123 = arith.mulf %120, %104 : vector<1x32xf32>
    %124 = arith.mulf %119, %121 : vector<1x32xf32>
    %125 = arith.addf %123, %124 : vector<1x32xf32>
    %126 = math.tanh %125 : vector<1x32xf32>
    %127 = arith.mulf %122, %126 : vector<1x32xf32>
    %c5_31 = arith.constant 5 : index
    %c0_32 = arith.constant 0 : index
    %128 = vector.load %arg6[%c5_31, %c0_32] : memref<8x32xf32, #tpu.memory_space<vmem>>, vector<1x32xf32>
    tpu.vector_store %arg6[%c5_31, %c0_32], %127 {strides = array<i32>} : memref<8x32xf32, #tpu.memory_space<vmem>>, vector<1x32xf32>,
    %c6 = arith.constant 6 : index
    %129 = memref.load %arg0[%c6] : memref<8xi32, #tpu.memory_space<smem>>
    %130 = arith.index_cast %129 : i32 to index
    %c0_33 = arith.constant 0 : index
    %131 = vector.load %arg1[%130, %c0_33] : memref<10x128xf32, #tpu.memory_space<vmem>>, vector<1x128xf32>
    %cst_34 = arith.constant dense<0.000000e+00> : vector<1x128xf32>
    %132 = tpu.matmul %127, %0, %cst_34 {dimension_numbers = #tpu.dot_dimension_numbers<[1], [0], [0], [1], [0, 0, 1, 1], [], []>} : vector<1x32xf32>, vector<32x128xf32>, vector<1x128xf32> -> vector<1x128xf32>
    %133 = arith.addf %131, %132 : vector<1x128xf32>
    %134 = arith.negf %133 : vector<1x128xf32>
    %135 = math.exp %134 : vector<1x128xf32>
    %cst_35 = arith.constant 1.000000e+00 : f32
    %136 = vector.broadcast %cst_35 : f32 to vector<1x128xf32>
    %137 = arith.addf %136, %135 : vector<1x128xf32>
    %138 = arith.divf %136, %137 : vector<1x128xf32>
    %139 = math.tanh %133 : vector<1x128xf32>
    %140 = vector.extract_strided_slice %138 {offsets = [0, 0], sizes = [1, 32], strides = [1, 1]} : vector<1x128xf32> to vector<1x32xf32>
    %141 = vector.extract_strided_slice %138 {offsets = [0, 32], sizes = [1, 32], strides = [1, 1]} : vector<1x128xf32> to vector<1x32xf32>
    %142 = vector.extract_strided_slice %139 {offsets = [0, 64], sizes = [1, 32], strides = [1, 1]} : vector<1x128xf32> to vector<1x32xf32>
    %143 = vector.extract_strided_slice %138 {offsets = [0, 96], sizes = [1, 32], strides = [1, 1]} : vector<1x128xf32> to vector<1x32xf32>
    %144 = arith.mulf %141, %125 : vector<1x32xf32>
    %145 = arith.mulf %140, %142 : vector<1x32xf32>
    %146 = arith.addf %144, %145 : vector<1x32xf32>
    %147 = math.tanh %146 : vector<1x32xf32>
    %148 = arith.mulf %143, %147 : vector<1x32xf32>
    %c6_36 = arith.constant 6 : index
    %c0_37 = arith.constant 0 : index
    %149 = vector.load %arg6[%c6_36, %c0_37] : memref<8x32xf32, #tpu.memory_space<vmem>>, vector<1x32xf32>
    tpu.vector_store %arg6[%c6_36, %c0_37], %148 {strides = array<i32>} : memref<8x32xf32, #tpu.memory_space<vmem>>, vector<1x32xf32>,
    %c7 = arith.constant 7 : index
    %150 = memref.load %arg0[%c7] : memref<8xi32, #tpu.memory_space<smem>>
    %151 = arith.index_cast %150 : i32 to index
    %c0_38 = arith.constant 0 : index
    %152 = vector.load %arg1[%151, %c0_38] : memref<10x128xf32, #tpu.memory_space<vmem>>, vector<1x128xf32>
    %cst_39 = arith.constant dense<0.000000e+00> : vector<1x128xf32>
    %153 = tpu.matmul %148, %0, %cst_39 {dimension_numbers = #tpu.dot_dimension_numbers<[1], [0], [0], [1], [0, 0, 1, 1], [], []>} : vector<1x32xf32>, vector<32x128xf32>, vector<1x128xf32> -> vector<1x128xf32>
    %154 = arith.addf %152, %153 : vector<1x128xf32>
    %155 = arith.negf %154 : vector<1x128xf32>
    %156 = math.exp %155 : vector<1x128xf32>
    %cst_40 = arith.constant 1.000000e+00 : f32
    %157 = vector.broadcast %cst_40 : f32 to vector<1x128xf32>
    %158 = arith.addf %157, %156 : vector<1x128xf32>
    %159 = arith.divf %157, %158 : vector<1x128xf32>
    %160 = math.tanh %154 : vector<1x128xf32>
    %161 = vector.extract_strided_slice %159 {offsets = [0, 0], sizes = [1, 32], strides = [1, 1]} : vector<1x128xf32> to vector<1x32xf32>
    %162 = vector.extract_strided_slice %159 {offsets = [0, 32], sizes = [1, 32], strides = [1, 1]} : vector<1x128xf32> to vector<1x32xf32>
    %163 = vector.extract_strided_slice %160 {offsets = [0, 64], sizes = [1, 32], strides = [1, 1]} : vector<1x128xf32> to vector<1x32xf32>
    %164 = vector.extract_strided_slice %159 {offsets = [0, 96], sizes = [1, 32], strides = [1, 1]} : vector<1x128xf32> to vector<1x32xf32>
    %165 = arith.mulf %162, %146 : vector<1x32xf32>
    %166 = arith.mulf %161, %163 : vector<1x32xf32>
    %167 = arith.addf %165, %166 : vector<1x32xf32>
    %168 = math.tanh %167 : vector<1x32xf32>
    %169 = arith.mulf %164, %168 : vector<1x32xf32>
    %c7_41 = arith.constant 7 : index
    %c0_42 = arith.constant 0 : index
    %170 = vector.load %arg6[%c7_41, %c0_42] : memref<8x32xf32, #tpu.memory_space<vmem>>, vector<1x32xf32>
    tpu.vector_store %arg6[%c7_41, %c0_42], %169 {strides = array<i32>} : memref<8x32xf32, #tpu.memory_space<vmem>>, vector<1x32xf32>,
    %c0_43 = arith.constant 0 : index
    %c0_44 = arith.constant 0 : index
    %171 = vector.load %arg6[%c0_43, %c0_44] : memref<8x32xf32, #tpu.memory_space<vmem>>, vector<8x32xf32>
    %c0_45 = arith.constant 0 : index
    %c0_46 = arith.constant 0 : index
    %172 = vector.load %arg3[%c0_45, %c0_46] : memref<32x128xf32, #tpu.memory_space<vmem>>, vector<32x128xf32>
    %cst_47 = arith.constant dense<0.000000e+00> : vector<8x128xf32>
    %173 = tpu.matmul %171, %172, %cst_47 {dimension_numbers = #tpu.dot_dimension_numbers<[1], [0], [0], [1], [0, 0, 1, 1], [], []>} : vector<8x32xf32>, vector<32x128xf32>, vector<8x128xf32> -> vector<8x128xf32>
    %c0_48 = arith.constant 0 : index
    %c0_49 = arith.constant 0 : index
    %174 = vector.load %arg4[%c0_48, %c0_49] : memref<1x128xf32, #tpu.memory_space<vmem>>, vector<1x128xf32>
    %175 = vector.broadcast %174 : vector<1x128xf32> to vector<8x128xf32>
    %176 = arith.addf %173, %175 : vector<8x128xf32>
    %cst_50 = arith.constant dense<0xFF800000> : vector<8xf32>
    %177 = vector.multi_reduction <maximumf>, %176, %cst_50 [1] : vector<8x128xf32> to vector<8xf32>
    %178 = vector.shape_cast %177 : vector<8xf32> to vector<8x1xf32>
    %179 = vector.broadcast %178 : vector<8x1xf32> to vector<8x128xf32>
    %180 = arith.subf %176, %179 : vector<8x128xf32>
    %181 = math.exp %180 : vector<8x128xf32>
    %cst_51 = arith.constant dense<0.000000e+00> : vector<8xf32>
    %182 = vector.multi_reduction <add>, %181, %cst_51 [1] : vector<8x128xf32> to vector<8xf32>
    %183 = vector.shape_cast %182 : vector<8xf32> to vector<8x1xf32>
    %184 = math.log %183 : vector<8x1xf32>
    %185 = vector.broadcast %184 : vector<8x1xf32> to vector<8x128xf32>
    %186 = arith.subf %180, %185 : vector<8x128xf32>
    %c0_52 = arith.constant 0 : index
    %c0_53 = arith.constant 0 : index
    %187 = vector.load %arg5[%c0_52, %c0_53] : memref<8x128xf32, #tpu.memory_space<vmem>>, vector<8x128xf32>
    tpu.vector_store %arg5[%c0_52, %c0_53], %186 {strides = array<i32>} : memref<8x128xf32, #tpu.memory_space<vmem>>, vector<8x128xf32>,
    return
  }
}

</mosaic_0001>

<llo_original>
// kernel: tpu_custom_call.1
$region0: #{tpu_custom_call.1}
  #allocation0 [shape = 'u32[]', space=smem, size = 0x4, offset = 0x4, fixed_abs, tag = 'smem constant byte address 0x4 - core index']
  #allocation1 [shape = 'u32[72,128]{1,0:T(1,128)}', space=vmem, size = 0x9000, scoped, tag = 'internal scratch']
  #allocation2 [shape = 'f32[8,32]{1,0:T(8,128)}', space=vmem, size = 0x1000, scoped, tag = 'scratch operand']
  %s0 = inlined_call_operand.hbm [shape: s32[8], index: 0, kind: input, shape index: {}]
  %s1 = inlined_call_operand.hbm [shape: f32[10,128], index: 1, kind: input, shape index: {}]
  %s2 = inlined_call_operand.hbm [shape: f32[32,128], index: 2, kind: input, shape index: {}]
  %s3 = inlined_call_operand.hbm [shape: f32[32,128], index: 3, kind: input, shape index: {}]
  %s4 = inlined_call_operand.vmem [shape: f32[1,128], index: 4, kind: input, shape index: {}]
  %s5 = inlined_call_operand.hbm [shape: f32[8,128], index: 5, kind: output, shape index: {}]
  %s6 = sld [smem:[#allocation0]]
  $region46: #{tpu_custom_call.1} parent=0
    _
  %s8 = ssub.s32 1, %s6
  %s9 = scalar_select 0, %s8, %s6
  $region1: #{tpu_custom_call.1} parent=0
    #allocation3 [shape = 'u8[512]{0}', space=smem, size = 0x200, scoped, tag = 'input window, operand 0, single buffered']
    #allocation4 [shape = 's32[1]{0}', space=sflag, size = 0x4, scoped, tag = 'scoped memory for tpu_custom_call.1']
    #allocation5 [shape = 's32[1]{0}', space=sflag, size = 0x4, scoped, tag = 'scoped memory for tpu_custom_call.1']
    #allocation6 [shape = 's32[1]{0}', space=sflag, size = 0x4, scoped, tag = 'scoped memory for tpu_custom_call.1']
    #allocation7 [shape = 'u8[8192]{0}', space=vmem, size = 0x2000, scoped, tag = 'input window, operand 1, single buffered']
    #allocation8 [shape = 'u8[16384]{0}', space=vmem, size = 0x4000, scoped, tag = 'input window, operand 2, single buffered']
    #allocation9 [shape = 's32[1]{0}', space=sflag, size = 0x4, scoped, tag = 'scoped memory for tpu_custom_call.1']
    #allocation10 [shape = 'u8[16384]{0}', space=vmem, size = 0x4000, scoped, tag = 'input window, operand 3, single buffered']
    #allocation11 [shape = 'u8[4096]{0}', space=vmem, size = 0x1000, scoped, tag = 'output window, operand 0, single buffered']
    %10 = vsyncpa [#allocation6], 0
    %11 = vsyncpa [#allocation4], 0
    %12 = vsyncpa [#allocation9], 0
    %13 = vsyncpa [#allocation5], 0
    // Predicated region
    $region2: #{tpu_custom_call.1} parent=1 // pred_check
      _
    $region3: #{tpu_custom_call.1} parent=1 // pred_check_branch
      %15 = sbr.rel (0) target = $region5
    $region4: #{tpu_custom_call.1} parent=1 // pred_region
      %17 = vsyncadd [#allocation6], 0
      %s19 = sshll.u32 %s0, 4
      %s20 = int_to_ptr.hbm [resolvable:$true] %s19
      %22 = dma.hbm_to_smem %s20, 16, [#allocation3], [#allocation6]
    $region5: #{tpu_custom_call.1} parent=1 // pred_fallthru
      _
    // Predicated region
    $region6: #{tpu_custom_call.1} parent=1 // pred_check
      _
    $region7: #{tpu_custom_call.1} parent=1 // pred_check_branch
      %24 = sbr.rel (0) target = $region9
    $region8: #{tpu_custom_call.1} parent=1 // pred_region
      %26 = vsyncadd [#allocation4], 0
      %s27 = sshll.u32 %s1, 4
      %s28 = int_to_ptr.hbm [resolvable:$true] %s27
      %s29 = sshll.u32 [#allocation7], 4
      %s30 = int_to_ptr.vmem [resolvable:$true] %s29
      %35 = dma.hbm_to_vmem [thread:$0]  %s28, 256, %s30, [#allocation4], 128, 128, 8
    $region9: #{tpu_custom_call.1} parent=1 // pred_fallthru
      _
    // Predicated region
    $region10: #{tpu_custom_call.1} parent=1 // pred_check
      _
    $region11: #{tpu_custom_call.1} parent=1 // pred_check_branch
      %37 = sbr.rel (0) target = $region13
    $region12: #{tpu_custom_call.1} parent=1 // pred_region
      %39 = vsyncadd [#allocation9], 0
      %s40 = sshll.u32 %s2, 4
      %s41 = int_to_ptr.hbm [resolvable:$true] %s40
      %s42 = sshll.u32 [#allocation8], 4
      %s43 = int_to_ptr.vmem [resolvable:$true] %s42
      %48 = dma.hbm_to_vmem [thread:$0]  %s41, 512, %s43, [#allocation9], 128, 128, 8
    $region13: #{tpu_custom_call.1} parent=1 // pred_fallthru
      _
    // Predicated region
    $region14: #{tpu_custom_call.1} parent=1 // pred_check
      _
    $region15: #{tpu_custom_call.1} parent=1 // pred_check_branch
      %50 = sbr.rel (0) target = $region17
    $region16: #{tpu_custom_call.1} parent=1 // pred_region
      %52 = vsyncadd [#allocation9], 0
      %s53 = sshll.u32 %s3, 4
      %s54 = int_to_ptr.hbm [resolvable:$true] %s53
      %s55 = sshll.u32 [#allocation10], 4
      %s56 = int_to_ptr.vmem [resolvable:$true] %s55
      %61 = dma.hbm_to_vmem [thread:$0]  %s54, 512, %s56, [#allocation9], 128, 128, 8
    $region17: #{tpu_custom_call.1} parent=1 // pred_fallthru
      _
    // Predicated region
    $region18: #{tpu_custom_call.1} parent=1 // pred_check
      _
    $region19: #{tpu_custom_call.1} parent=1 // pred_check_branch
      %63 = sbr.rel (0) target = $region21
    $region20: #{tpu_custom_call.1} parent=1 // pred_region
      _
    $region21: #{tpu_custom_call.1} parent=1 // pred_fallthru
      _
    // Predicated region
    $region22: #{tpu_custom_call.1} parent=1 // pred_check
      _
    $region23: #{tpu_custom_call.1} parent=1 // pred_check_branch
      %65 = sbr.rel (0) target = $region25
    $region24: #{tpu_custom_call.1} parent=1 // pred_region
      %67 = dma.done [#allocation6], 16
    $region25: #{tpu_custom_call.1} parent=1 // pred_fallthru
      _
    // Predicated region
    $region26: #{tpu_custom_call.1} parent=1 // pred_check
      _
    $region27: #{tpu_custom_call.1} parent=1 // pred_check_branch
      %69 = sbr.rel (0) target = $region29
    $region28: #{tpu_custom_call.1} parent=1 // pred_region
      %71 = dma.done [#allocation4], 256
    $region29: #{tpu_custom_call.1} parent=1 // pred_fallthru
      _
    // Predicated region
    $region30: #{tpu_custom_call.1} parent=1 // pred_check
      _
    $region31: #{tpu_custom_call.1} parent=1 // pred_check_branch
      %73 = sbr.rel (0) target = $region33
    $region32: #{tpu_custom_call.1} parent=1 // pred_region
      %75 = dma.done [#allocation9], 512
    $region33: #{tpu_custom_call.1} parent=1 // pred_fallthru
      _
    // Predicated region
    $region34: #{tpu_custom_call.1} parent=1 // pred_check
      _
    $region35: #{tpu_custom_call.1} parent=1 // pred_check_branch
      %77 = sbr.rel (0) target = $region37
    $region36: #{tpu_custom_call.1} parent=1 // pred_region
      %79 = dma.done [#allocation9], 512
    $region37: #{tpu_custom_call.1} parent=1 // pred_fallthru
      _
    %80 = sfence
    %v81 = vld [vmem:[#allocation8] sm:$0xff]
    %v82 = vld [vmem:[#allocation8 + $0x8] sm:$0xff]
    %v83 = vld [vmem:[#allocation8 + $0x10] sm:$0xff]
    %v84 = vld [vmem:[#allocation8 + $0x18] sm:$0xff]
    %s85 = sld [smem:[#allocation3]]
    %s86 = scalar_lea.vmem [#allocation7], %s85
    %v87 = vld [vmem:[%s86] sm:$0x1]
    %vm88 = vcmask 261120
    %v90 = vsel %vm88, 0.0, 0
    %92 = vmatpush.msra.mxu0 0.0
    %93 = vmatpush.msra.mxu0 0.0
    %94 = vmatpush.msra.mxu0 0.0
    %95 = vmatpush.msra.mxu0 0.0
    %96 = vmatpush.msra.mxu0 0.0
    %97 = vmatpush.msra.mxu0 0.0
    %98 = vmatpush.msra.mxu0 0.0
    %99 = vmatpush.msra.mxu0 0.0
    %100 = vmatpush.msra.mxu0 0.0
    %101 = vmatpush.msra.mxu0 0.0
    %102 = vmatpush.msra.mxu0 0.0
    %103 = vmatpush.msra.mxu0 0.0
    %104 = vmatpush.msra.mxu0 %v84
    %105 = vmatpush.msra.mxu0 %v83
    %106 = vmatpush.msra.mxu0 %v82
    %107 = vmatpush.msra.mxu0 %v81
    %108 = vmatmul.f32.gmra.mxu0 %v90
    %v109 = vpop.f32.mrf.mxu0
    %v110 = vadd.f32 0.0, %v109
    %111 = vdwg.mxu0
    %v112 = vadd.f32 %v87, %v110
    %v113 = vxor.u32 %v112, 2147483648
    %v114 = vmul.f32 %v113, 1.442695
    %v115 = vpow.pop %v114
    %v116 = vadd.f32 %v115, 1.0
    %v117 = vrcp.pop %v116
    %v118 = vmul.f32 %v116, %v117
    %v119 = vsub.f32 1.0, %v118
    %v120 = vmul.f32 %v117, %v119
    %v121 = vadd.f32 %v117, %v120
    %vm122 = vweird.f32 %v116
    %vm123 = vweird.f32 %v117
    %vm124 = vmor %vm122, %vm123
    %v125 = vsel %vm124, %v117, %v121
    %v126 = vand.u32 2147483647, %v116
    %vm127 = vcmp.eq.f32.partialorder %v126, 8.507059e+37
    %v128 = vand.u32 %v116, 2147483648
    %v129 = vor.u32 1.1754944e-38, %v128
    %v130 = vsel %vm127, %v129, %v125
    %v131 = vmul.f32 1.0, %v130
    %v132 = vtanh.pop %v112
    %v133 = vmul.f32 %v131, 0.0
    %135 = vrot.lane.b32.xlu0 %v132, 64
    %v136 = vpop.permute.xlu0 %135
    %v138 = vmul.f32 %v131, %v136
    %140 = vrot.lane.b32.xlu0 %v138, 32
    %v141 = vpop.permute.xlu0 %140
    %v143 = vadd.f32 %v133, %v141
    %v144 = vtanh.pop %v143
    %146 = vrot.lane.b32.xlu0 %v144, 64
    %v147 = vpop.permute.xlu0 %146
    %v149 = vmul.f32 %v131, %v147
    %151 = vrot.lane.b32.xlu0 %v149, 32
    %v152 = vpop.permute.xlu0 %151
    %vm154 = vcmask 253952
    %155 = vst.msk [vmem:[#allocation2] sm:$0x1] %vm154, %v152
    %s156 = sld [smem:[#allocation3 + $0x1]]
    %s157 = scalar_lea.vmem [#allocation7], %s156
    %v158 = vld [vmem:[%s157] sm:$0x1]
    %v159 = vsel %vm88, %v152, 0
    %161 = vmatpush.msra.mxu0 0.0
    %162 = vmatpush.msra.mxu0 0.0
    %163 = vmatpush.msra.mxu0 0.0
    %164 = vmatpush.msra.mxu0 0.0
    %165 = vmatpush.msra.mxu0 0.0
    %166 = vmatpush.msra.mxu0 0.0
    %167 = vmatpush.msra.mxu0 0.0
    %168 = vmatpush.msra.mxu0 0.0
    %169 = vmatpush.msra.mxu0 0.0
    %170 = vmatpush.msra.mxu0 0.0
    %171 = vmatpush.msra.mxu0 0.0
    %172 = vmatpush.msra.mxu0 0.0
    %173 = vmatpush.msra.mxu0 %v84
    %174 = vmatpush.msra.mxu0 %v83
    %175 = vmatpush.msra.mxu0 %v82
    %176 = vmatpush.msra.mxu0 %v81
    %177 = vmatmul.f32.gmra.mxu0 %v159
    %v178 = vpop.f32.mrf.mxu0
    %v179 = vadd.f32 0.0, %v178
    %180 = vdwg.mxu0
    %v181 = vadd.f32 %v158, %v179
    %v182 = vxor.u32 %v181, 2147483648
    %v183 = vmul.f32 %v182, 1.442695
    %v184 = vpow.pop %v183
    %v185 = vadd.f32 %v184, 1.0
    %v186 = vrcp.pop %v185
    %v187 = vmul.f32 %v185, %v186
    %v188 = vsub.f32 1.0, %v187
    %v189 = vmul.f32 %v186, %v188
    %v190 = vadd.f32 %v186, %v189
    %vm191 = vweird.f32 %v185
    %vm192 = vweird.f32 %v186
    %vm193 = vmor %vm191, %vm192
    %v194 = vsel %vm193, %v186, %v190
    %v195 = vand.u32 2147483647, %v185
    %vm196 = vcmp.eq.f32.partialorder %v195, 8.507059e+37
    %v197 = vand.u32 %v185, 2147483648
    %v198 = vor.u32 1.1754944e-38, %v197
    %v199 = vsel %vm196, %v198, %v194
    %v200 = vmul.f32 1.0, %v199
    %v201 = vtanh.pop %v181
    %v202 = vmul.f32 %v200, %v143
    %204 = vrot.lane.b32.xlu0 %v201, 64
    %v205 = vpop.permute.xlu0 %204
    %v207 = vmul.f32 %v200, %v205
    %209 = vrot.lane.b32.xlu0 %v207, 32
    %v210 = vpop.permute.xlu0 %209
    %v212 = vadd.f32 %v202, %v210
    %v213 = vtanh.pop %v212
    %215 = vrot.lane.b32.xlu0 %v213, 64
    %v216 = vpop.permute.xlu0 %215
    %v218 = vmul.f32 %v200, %v216
    %220 = vrot.lane.b32.xlu0 %v218, 32
    %v221 = vpop.permute.xlu0 %220
    %223 = vst.msk [vmem:[#allocation2 + $0x1] sm:$0x1] %vm154, %v221
    %s224 = sld [smem:[#allocation3 + $0x2]]
    %s225 = scalar_lea.vmem [#allocation7], %s224
    %v226 = vld [vmem:[%s225] sm:$0x1]
    %v227 = vsel %vm88, %v221, 0
    %229 = vmatpush.msra.mxu0 0.0
    %230 = vmatpush.msra.mxu0 0.0
    %231 = vmatpush.msra.mxu0 0.0
    %232 = vmatpush.msra.mxu0 0.0
    %233 = vmatpush.msra.mxu0 0.0
    %234 = vmatpush.msra.mxu0 0.0
    %235 = vmatpush.msra.mxu0 0.0
    %236 = vmatpush.msra.mxu0 0.0
    %237 = vmatpush.msra.mxu0 0.0
    %238 = vmatpush.msra.mxu0 0.0
    %239 = vmatpush.msra.mxu0 0.0
    %240 = vmatpush.msra.mxu0 0.0
    %241 = vmatpush.msra.mxu0 %v84
    %242 = vmatpush.msra.mxu0 %v83
    %243 = vmatpush.msra.mxu0 %v82
    %244 = vmatpush.msra.mxu0 %v81
    %245 = vmatmul.f32.gmra.mxu0 %v227
    %v246 = vpop.f32.mrf.mxu0
    %v247 = vadd.f32 0.0, %v246
    %248 = vdwg.mxu0
    %v249 = vadd.f32 %v226, %v247
    %v250 = vxor.u32 %v249, 2147483648
    %v251 = vmul.f32 %v250, 1.442695
    %v252 = vpow.pop %v251
    %v253 = vadd.f32 %v252, 1.0
    %v254 = vrcp.pop %v253
    %v255 = vmul.f32 %v253, %v254
    %v256 = vsub.f32 1.0, %v255
    %v257 = vmul.f32 %v254, %v256
    %v258 = vadd.f32 %v254, %v257
    %vm259 = vweird.f32 %v253
    %vm260 = vweird.f32 %v254
    %vm261 = vmor %vm259, %vm260
    %v262 = vsel %vm261, %v254, %v258
    %v263 = vand.u32 2147483647, %v253
    %vm264 = vcmp.eq.f32.partialorder %v263, 8.507059e+37
    %v265 = vand.u32 %v253, 2147483648
    %v266 = vor.u32 1.1754944e-38, %v265
    %v267 = vsel %vm264, %v266, %v262
    %v268 = vmul.f32 1.0, %v267
    %v269 = vtanh.pop %v249
    %v270 = vmul.f32 %v268, %v212
    %272 = vrot.lane.b32.xlu0 %v269, 64
    %v273 = vpop.permute.xlu0 %272
    %v275 = vmul.f32 %v268, %v273
    %277 = vrot.lane.b32.xlu0 %v275, 32
    %v278 = vpop.permute.xlu0 %277
    %v280 = vadd.f32 %v270, %v278
    %v281 = vtanh.pop %v280
    %283 = vrot.lane.b32.xlu0 %v281, 64
    %v284 = vpop.permute.xlu0 %283
    %v286 = vmul.f32 %v268, %v284
    %288 = vrot.lane.b32.xlu0 %v286, 32
    %v289 = vpop.permute.xlu0 %288
    %291 = vst.msk [vmem:[#allocation2 + $0x2] sm:$0x1] %vm154, %v289
    %s292 = sld [smem:[#allocation3 + $0x3]]
    %s293 = scalar_lea.vmem [#allocation7], %s292
    %v294 = vld [vmem:[%s293] sm:$0x1]
    %v295 = vsel %vm88, %v289, 0
    %297 = vmatpush.msra.mxu0 0.0
    %298 = vmatpush.msra.mxu0 0.0
    %299 = vmatpush.msra.mxu0 0.0
    %300 = vmatpush.msra.mxu0 0.0
    %301 = vmatpush.msra.mxu0 0.0
    %302 = vmatpush.msra.mxu0 0.0
    %303 = vmatpush.msra.mxu0 0.0
    %304 = vmatpush.msra.mxu0 0.0
    %305 = vmatpush.msra.mxu0 0.0
    %306 = vmatpush.msra.mxu0 0.0
    %307 = vmatpush.msra.mxu0 0.0
    %308 = vmatpush.msra.mxu0 0.0
    %309 = vmatpush.msra.mxu0 %v84
    %310 = vmatpush.msra.mxu0 %v83
    %311 = vmatpush.msra.mxu0 %v82
    %312 = vmatpush.msra.mxu0 %v81
    %313 = vmatmul.f32.gmra.mxu0 %v295
    %v314 = vpop.f32.mrf.mxu0
    %v315 = vadd.f32 0.0, %v314
    %316 = vdwg.mxu0
    %v317 = vadd.f32 %v294, %v315
    %v318 = vxor.u32 %v317, 2147483648
    %v319 = vmul.f32 %v318, 1.442695
    %v320 = vpow.pop %v319
    %v321 = vadd.f32 %v320, 1.0
    %v322 = vrcp.pop %v321
    %v323 = vmul.f32 %v321, %v322
    %v324 = vsub.f32 1.0, %v323
    %v325 = vmul.f32 %v322, %v324
    %v326 = vadd.f32 %v322, %v325
    %vm327 = vweird.f32 %v321
    %vm328 = vweird.f32 %v322
    %vm329 = vmor %vm327, %vm328
    %v330 = vsel %vm329, %v322, %v326
    %v331 = vand.u32 2147483647, %v321
    %vm332 = vcmp.eq.f32.partialorder %v331, 8.507059e+37
    %v333 = vand.u32 %v321, 2147483648
    %v334 = vor.u32 1.1754944e-38, %v333
    %v335 = vsel %vm332, %v334, %v330
    %v336 = vmul.f32 1.0, %v335
    %v337 = vtanh.pop %v317
    %v338 = vmul.f32 %v336, %v280
    %340 = vrot.lane.b32.xlu0 %v337, 64
    %v341 = vpop.permute.xlu0 %340
    %v343 = vmul.f32 %v336, %v341
    %345 = vrot.lane.b32.xlu0 %v343, 32
    %v346 = vpop.permute.xlu0 %345
    %v348 = vadd.f32 %v338, %v346
    %v349 = vtanh.pop %v348
    %351 = vrot.lane.b32.xlu0 %v349, 64
    %v352 = vpop.permute.xlu0 %351
    %v354 = vmul.f32 %v336, %v352
    %356 = vrot.lane.b32.xlu0 %v354, 32
    %v357 = vpop.permute.xlu0 %356
    %359 = vst.msk [vmem:[#allocation2 + $0x3] sm:$0x1] %vm154, %v357
    %s360 = sld [smem:[#allocation3 + $0x4]]
    %s361 = scalar_lea.vmem [#allocation7], %s360
    %v362 = vld [vmem:[%s361] sm:$0x1]
    %v363 = vsel %vm88, %v357, 0
    %365 = vmatpush.msra.mxu0 0.0
    %366 = vmatpush.msra.mxu0 0.0
    %367 = vmatpush.msra.mxu0 0.0
    %368 = vmatpush.msra.mxu0 0.0
    %369 = vmatpush.msra.mxu0 0.0
    %370 = vmatpush.msra.mxu0 0.0
    %371 = vmatpush.msra.mxu0 0.0
    %372 = vmatpush.msra.mxu0 0.0
    %373 = vmatpush.msra.mxu0 0.0
    %374 = vmatpush.msra.mxu0 0.0
    %375 = vmatpush.msra.mxu0 0.0
    %376 = vmatpush.msra.mxu0 0.0
    %377 = vmatpush.msra.mxu0 %v84
    %378 = vmatpush.msra.mxu0 %v83
    %379 = vmatpush.msra.mxu0 %v82
    %380 = vmatpush.msra.mxu0 %v81
    %381 = vmatmul.f32.gmra.mxu0 %v363
    %v382 = vpop.f32.mrf.mxu0
    %v383 = vadd.f32 0.0, %v382
    %384 = vdwg.mxu0
    %v385 = vadd.f32 %v362, %v383
    %v386 = vxor.u32 %v385, 2147483648
    %v387 = vmul.f32 %v386, 1.442695
    %v388 = vpow.pop %v387
    %v389 = vadd.f32 %v388, 1.0
    %v390 = vrcp.pop %v389
    %v391 = vmul.f32 %v389, %v390
    %v392 = vsub.f32 1.0, %v391
    %v393 = vmul.f32 %v390, %v392
    %v394 = vadd.f32 %v390, %v393
    %vm395 = vweird.f32 %v389
    %vm396 = vweird.f32 %v390
    %vm397 = vmor %vm395, %vm396
    %v398 = vsel %vm397, %v390, %v394
    %v399 = vand.u32 2147483647, %v389
    %vm400 = vcmp.eq.f32.partialorder %v399, 8.507059e+37
    %v401 = vand.u32 %v389, 2147483648
    %v402 = vor.u32 1.1754944e-38, %v401
    %v403 = vsel %vm400, %v402, %v398
    %v404 = vmul.f32 1.0, %v403
    %v405 = vtanh.pop %v385
    %v406 = vmul.f32 %v404, %v348
    %408 = vrot.lane.b32.xlu0 %v405, 64
    %v409 = vpop.permute.xlu0 %408
    %v411 = vmul.f32 %v404, %v409
    %413 = vrot.lane.b32.xlu0 %v411, 32
    %v414 = vpop.permute.xlu0 %413
    %v416 = vadd.f32 %v406, %v414
    %v417 = vtanh.pop %v416
    %419 = vrot.lane.b32.xlu0 %v417, 64
    %v420 = vpop.permute.xlu0 %419
    %v422 = vmul.f32 %v404, %v420
    %424 = vrot.lane.b32.xlu0 %v422, 32
    %v425 = vpop.permute.xlu0 %424
    %427 = vst.msk [vmem:[#allocation2 + $0x4] sm:$0x1] %vm154, %v425
    %s428 = sld [smem:[#allocation3 + $0x5]]
    %s429 = scalar_lea.vmem [#allocation7], %s428
    %v430 = vld [vmem:[%s429] sm:$0x1]
    %v431 = vsel %vm88, %v425, 0
    %433 = vmatpush.msra.mxu0 0.0
    %434 = vmatpush.msra.mxu0 0.0
    %435 = vmatpush.msra.mxu0 0.0
    %436 = vmatpush.msra.mxu0 0.0
    %437 = vmatpush.msra.mxu0 0.0
    %438 = vmatpush.msra.mxu0 0.0
    %439 = vmatpush.msra.mxu0 0.0
    %440 = vmatpush.msra.mxu0 0.0
    %441 = vmatpush.msra.mxu0 0.0
    %442 = vmatpush.msra.mxu0 0.0
    %443 = vmatpush.msra.mxu0 0.0
    %444 = vmatpush.msra.mxu0 0.0
    %445 = vmatpush.msra.mxu0 %v84
    %446 = vmatpush.msra.mxu0 %v83
    %447 = vmatpush.msra.mxu0 %v82
    %448 = vmatpush.msra.mxu0 %v81
    %449 = vmatmul.f32.gmra.mxu0 %v431
    %v450 = vpop.f32.mrf.mxu0
    %v451 = vadd.f32 0.0, %v450
    %452 = vdwg.mxu0
    %v453 = vadd.f32 %v430, %v451
    %v454 = vxor.u32 %v453, 2147483648
    %v455 = vmul.f32 %v454, 1.442695
    %v456 = vpow.pop %v455
    %v457 = vadd.f32 %v456, 1.0
    %v458 = vrcp.pop %v457
    %v459 = vmul.f32 %v457, %v458
    %v460 = vsub.f32 1.0, %v459
    %v461 = vmul.f32 %v458, %v460
    %v462 = vadd.f32 %v458, %v461
    %vm463 = vweird.f32 %v457
    %vm464 = vweird.f32 %v458
    %vm465 = vmor %vm463, %vm464
    %v466 = vsel %vm465, %v458, %v462
    %v467 = vand.u32 2147483647, %v457
    %vm468 = vcmp.eq.f32.partialorder %v467, 8.507059e+37
    %v469 = vand.u32 %v457, 2147483648
    %v470 = vor.u32 1.1754944e-38, %v469
    %v471 = vsel %vm468, %v470, %v466
    %v472 = vmul.f32 1.0, %v471
    %v473 = vtanh.pop %v453
    %v474 = vmul.f32 %v472, %v416
    %476 = vrot.lane.b32.xlu0 %v473, 64
    %v477 = vpop.permute.xlu0 %476
    %v479 = vmul.f32 %v472, %v477
    %481 = vrot.lane.b32.xlu0 %v479, 32
    %v482 = vpop.permute.xlu0 %481
    %v484 = vadd.f32 %v474, %v482
    %v485 = vtanh.pop %v484
    %487 = vrot.lane.b32.xlu0 %v485, 64
    %v488 = vpop.permute.xlu0 %487
    %v490 = vmul.f32 %v472, %v488
    %492 = vrot.lane.b32.xlu0 %v490, 32
    %v493 = vpop.permute.xlu0 %492
    %495 = vst.msk [vmem:[#allocation2 + $0x5] sm:$0x1] %vm154, %v493
    %s496 = sld [smem:[#allocation3 + $0x6]]
    %s497 = scalar_lea.vmem [#allocation7], %s496
    %v498 = vld [vmem:[%s497] sm:$0x1]
    %v499 = vsel %vm88, %v493, 0
    %501 = vmatpush.msra.mxu0 0.0
    %502 = vmatpush.msra.mxu0 0.0
    %503 = vmatpush.msra.mxu0 0.0
    %504 = vmatpush.msra.mxu0 0.0
    %505 = vmatpush.msra.mxu0 0.0
    %506 = vmatpush.msra.mxu0 0.0
    %507 = vmatpush.msra.mxu0 0.0
    %508 = vmatpush.msra.mxu0 0.0
    %509 = vmatpush.msra.mxu0 0.0
    %510 = vmatpush.msra.mxu0 0.0
    %511 = vmatpush.msra.mxu0 0.0
    %512 = vmatpush.msra.mxu0 0.0
    %513 = vmatpush.msra.mxu0 %v84
    %514 = vmatpush.msra.mxu0 %v83
    %515 = vmatpush.msra.mxu0 %v82
    %516 = vmatpush.msra.mxu0 %v81
    %517 = vmatmul.f32.gmra.mxu0 %v499
    %v518 = vpop.f32.mrf.mxu0
    %v519 = vadd.f32 0.0, %v518
    %520 = vdwg.mxu0
    %v521 = vadd.f32 %v498, %v519
    %v522 = vxor.u32 %v521, 2147483648
    %v523 = vmul.f32 %v522, 1.442695
    %v524 = vpow.pop %v523
    %v525 = vadd.f32 %v524, 1.0
    %v526 = vrcp.pop %v525
    %v527 = vmul.f32 %v525, %v526
    %v528 = vsub.f32 1.0, %v527
    %v529 = vmul.f32 %v526, %v528
    %v530 = vadd.f32 %v526, %v529
    %vm531 = vweird.f32 %v525
    %vm532 = vweird.f32 %v526
    %vm533 = vmor %vm531, %vm532
    %v534 = vsel %vm533, %v526, %v530
    %v535 = vand.u32 2147483647, %v525
    %vm536 = vcmp.eq.f32.partialorder %v535, 8.507059e+37
    %v537 = vand.u32 %v525, 2147483648
    %v538 = vor.u32 1.1754944e-38, %v537
    %v539 = vsel %vm536, %v538, %v534
    %v540 = vmul.f32 1.0, %v539
    %v541 = vtanh.pop %v521
    %v542 = vmul.f32 %v540, %v484
    %544 = vrot.lane.b32.xlu0 %v541, 64
    %v545 = vpop.permute.xlu0 %544
    %v547 = vmul.f32 %v540, %v545
    %549 = vrot.lane.b32.xlu0 %v547, 32
    %v550 = vpop.permute.xlu0 %549
    %v552 = vadd.f32 %v542, %v550
    %v553 = vtanh.pop %v552
    %555 = vrot.lane.b32.xlu0 %v553, 64
    %v556 = vpop.permute.xlu0 %555
    %v558 = vmul.f32 %v540, %v556
    %560 = vrot.lane.b32.xlu0 %v558, 32
    %v561 = vpop.permute.xlu0 %560
    %563 = vst.msk [vmem:[#allocation2 + $0x6] sm:$0x1] %vm154, %v561
    %s564 = sld [smem:[#allocation3 + $0x7]]
    %s565 = scalar_lea.vmem [#allocation7], %s564
    %v566 = vld [vmem:[%s565] sm:$0x1]
    %v567 = vsel %vm88, %v561, 0
    %569 = vmatpush.msra.mxu0 0.0
    %570 = vmatpush.msra.mxu0 0.0
    %571 = vmatpush.msra.mxu0 0.0
    %572 = vmatpush.msra.mxu0 0.0
    %573 = vmatpush.msra.mxu0 0.0
    %574 = vmatpush.msra.mxu0 0.0
    %575 = vmatpush.msra.mxu0 0.0
    %576 = vmatpush.msra.mxu0 0.0
    %577 = vmatpush.msra.mxu0 0.0
    %578 = vmatpush.msra.mxu0 0.0
    %579 = vmatpush.msra.mxu0 0.0
    %580 = vmatpush.msra.mxu0 0.0
    %581 = vmatpush.msra.mxu0 %v84
    %582 = vmatpush.msra.mxu0 %v83
    %583 = vmatpush.msra.mxu0 %v82
    %584 = vmatpush.msra.mxu0 %v81
    %585 = vmatmul.f32.gmra.mxu0 %v567
    %v586 = vpop.f32.mrf.mxu0
    %v587 = vadd.f32 0.0, %v586
    %588 = vdwg.mxu0
    %v589 = vadd.f32 %v566, %v587
    %v590 = vxor.u32 %v589, 2147483648
    %v591 = vmul.f32 %v590, 1.442695
    %v592 = vpow.pop %v591
    %v593 = vadd.f32 %v592, 1.0
    %v594 = vrcp.pop %v593
    %v595 = vmul.f32 %v593, %v594
    %v596 = vsub.f32 1.0, %v595
    %v597 = vmul.f32 %v594, %v596
    %v598 = vadd.f32 %v594, %v597
    %vm599 = vweird.f32 %v593
    %vm600 = vweird.f32 %v594
    %vm601 = vmor %vm599, %vm600
    %v602 = vsel %vm601, %v594, %v598
    %v603 = vand.u32 2147483647, %v593
    %vm604 = vcmp.eq.f32.partialorder %v603, 8.507059e+37
    %v605 = vand.u32 %v593, 2147483648
    %v606 = vor.u32 1.1754944e-38, %v605
    %v607 = vsel %vm604, %v606, %v602
    %v608 = vmul.f32 1.0, %v607
    %v609 = vtanh.pop %v589
    %v610 = vmul.f32 %v608, %v552
    %612 = vrot.lane.b32.xlu0 %v609, 64
    %v613 = vpop.permute.xlu0 %612
    %v615 = vmul.f32 %v608, %v613
    %617 = vrot.lane.b32.xlu0 %v615, 32
    %v618 = vpop.permute.xlu0 %617
    %v620 = vadd.f32 %v610, %v618
    %v621 = vtanh.pop %v620
    %623 = vrot.lane.b32.xlu0 %v621, 64
    %v624 = vpop.permute.xlu0 %623
    %v626 = vmul.f32 %v608, %v624
    %628 = vrot.lane.b32.xlu0 %v626, 32
    %v629 = vpop.permute.xlu0 %628
    %631 = vst.msk [vmem:[#allocation2 + $0x7] sm:$0x1] %vm154, %v629
    %v632 = vld [vmem:[#allocation2] sm:$0xff]
    %v633 = vld [vmem:[#allocation10] sm:$0xff]
    %v634 = vld [vmem:[#allocation10 + $0x8] sm:$0xff]
    %v635 = vld [vmem:[#allocation10 + $0x10] sm:$0xff]
    %v636 = vld [vmem:[#allocation10 + $0x18] sm:$0xff]
    %v637 = vld [vmem:[%s4] sm:$0x1]
    %v639 = vperm.slane %v637, 0
    %v642 = vsel %vm88, %v632, 0
    %644 = vmatpush.msra.mxu0 0.0
    %645 = vmatpush.msra.mxu0 0.0
    %646 = vmatpush.msra.mxu0 0.0
    %647 = vmatpush.msra.mxu0 0.0
    %648 = vmatpush.msra.mxu0 0.0
    %649 = vmatpush.msra.mxu0 0.0
    %650 = vmatpush.msra.mxu0 0.0
    %651 = vmatpush.msra.mxu0 0.0
    %652 = vmatpush.msra.mxu0 0.0
    %653 = vmatpush.msra.mxu0 0.0
    %654 = vmatpush.msra.mxu0 0.0
    %655 = vmatpush.msra.mxu0 0.0
    %656 = vmatpush.msra.mxu0 %v636
    %657 = vmatpush.msra.mxu0 %v635
    %658 = vmatpush.msra.mxu0 %v634
    %659 = vmatpush.msra.mxu0 %v633
    %660 = vmatmul.f32.gmra.mxu0 %v642
    %v661 = vpop.f32.mrf.mxu0
    %v662 = vadd.f32 %v639, %v661
    %663 = vdwg.mxu0
    %664 = vmax.xlane.f32.xlu0 %v662
    %v665 = vpop.xlane.xlu0 %664
    %v666 = vsub.f32 %v662, %v665
    %v667 = vmul.f32 %v666, 1.442695
    %v668 = vpow.pop %v667
    %669 = vadd.xlane.f32.xlu0 %v668
    %v670 = vpop.xlane.xlu0 %669
    %v671 = vlog2.pop %v670
    %v672 = vmul.f32 %v671, 0.6931472
    %v673 = vsub.f32 %v666, %v672
    %674 = vst [vmem:[#allocation11] sm:$0xff] %v673
    // Predicated region
    $region38: #{tpu_custom_call.1} parent=1 // pred_check
      _
    $region39: #{tpu_custom_call.1} parent=1 // pred_check_branch
      %676 = sbr.rel (0) target = $region41
    $region40: #{tpu_custom_call.1} parent=1 // pred_region
      %678 = vsyncadd [#allocation5], 0
      %s680 = sshll.u32 [#allocation11], 4
      %s681 = int_to_ptr.vmem [resolvable:$true] %s680
      %s682 = sshll.u32 %s5, 4
      %s683 = int_to_ptr.hbm [resolvable:$true] %s682
      %685 = dma.vmem_to_hbm [thread:$0]  %s681, 128, %s683, [#allocation5]
    $region41: #{tpu_custom_call.1} parent=1 // pred_fallthru
      _
    // Predicated region
    $region42: #{tpu_custom_call.1} parent=1 // pred_check
      _
    $region43: #{tpu_custom_call.1} parent=1 // pred_check_branch
      %687 = sbr.rel (0) target = $region45
    $region44: #{tpu_custom_call.1} parent=1 // pred_region
      %689 = dma.done [#allocation5], 128
    $region45: #{tpu_custom_call.1} parent=1 // pred_fallthru
      _
    %690 = vsyncpa [#allocation4], 1
    %691 = vsyncpa [#allocation9], 1
    %692 = vsyncpa [#allocation5], 1
    %693 = vsyncpa [#allocation6], 1

</llo_original>
